<compile_context>
chip_gen: v6e
topology: v6e:2x2x1
jax: 0.10.0
libtpu: 0.0.40
codegen_flags: <defaults>
</compile_context>

<pallas_src>
import jax
import jax.numpy as jnp
from jax.experimental import pallas as pl
from jax.experimental.pallas import tpu as pltpu

NUM_CLASSES = 8                  # len(classtype)
PACK = 16                        # samples packed per 128-lane row
LANES = PACK * NUM_CLASSES       # 128

TB_ROWS_MAX = 2048               # 2048 rows * 128 lanes * 4 B = 1 MiB f32 per block
MIN_TB_ROWS = 64                 # don't bother with tiles below 32 KiB
TARGET_GRID_STEPS = 8            # >=8 even-ish steps: megacore + full DMA pipeline
SMALL_BATCH_ROWS = 64            # rows <= 64 (B <= 1024): plain XLA fallback


def _round_up(x, m):
    return ((x + m - 1) // m) * m


def _sublane_multiple(dtype):
    # f32 -> 8 sublanes, bf16 -> 16, int8/fp8 -> 32 (packed sublane layout).
    return 8 * max(1, 4 // jnp.dtype(dtype).itemsize)


def _fcn_kernel(x_ref, wt_ref, b_ref, o_ref):
    # x_ref:  (tb, 128)   packed activations (16 samples per row)
    # wt_ref: (128, 128)  block-diagonal packed W^T (VMEM-resident across grid)
    # b_ref:  (1, 128)    tiled bias (VMEM-resident)
    # o_ref:  (tb, 128)   lane-dense output
    acc = jnp.dot(x_ref[...], wt_ref[...], preferred_element_type=jnp.float32)
    o_ref[...] = (acc + b_ref[...].astype(jnp.float32)).astype(o_ref.dtype)


def prepare_fcn_params(weight, bias, param_dtype=jnp.float32):
    """One-time parameter packing (hoisted out of the forward hot path).

    weight: (F_out, F_in) as in torch.nn.Linear, bias: (F_out,).
    param_dtype=jnp.bfloat16 enables the v5e-friendly bf16 MXU path (looser
    accuracy).  Returns (w_packed (128,128) block-diagonal, b_packed (1,128)).
    """
    wt = weight.astype(param_dtype).T                              # (F_in, F_out)
    w_packed = jnp.kron(jnp.eye(PACK, dtype=param_dtype), wt)      # (128, 128)
    b_packed = jnp.tile(bias.astype(param_dtype), PACK).reshape(1, LANES)
    return w_packed, b_packed


def fcn_forward(x, w_packed, b_packed, *, min_kernel_rows=SMALL_BATCH_ROWS):
    """x: (B, ...) with prod(...) == NUM_CLASSES (torch.flatten(x, 1) semantics)."""
    B = x.shape[0]
    x2 = x.reshape(B, -1)
    assert x2.shape[1] == NUM_CLASSES, (
        f"expected {NUM_CLASSES} flattened features, got {x2.shape[1]}")

    compute_dtype = w_packed.dtype
    if x2.dtype != compute_dtype:
        x2 = x2.astype(compute_dtype)

    rows = pl.cdiv(B, PACK)

    # Tiny-batch fallback: let XLA fuse a (B,8)@(8,8) matmul; pallas launch,
    # pad and reshape overhead would dominate at this size.
    if rows <= min_kernel_rows:
        wt = w_packed[:NUM_CLASSES, :NUM_CLASSES]       # top-left block == W^T
        b = b_packed[0, :NUM_CLASSES]
        return (x2 @ wt + b).astype(compute_dtype)

    # Pad only to the sublane multiple (8 rows f32 / 16 rows bf16), never to tb.
    sub = _sublane_multiple(compute_dtype)
    rows_pad = _round_up(rows, sub)
    total = rows_pad * PACK
    if total != B:
        x2 = jnp.pad(x2, ((0, total - B), (0, 0)))
    xp = x2.reshape(rows_pad, LANES)

    # Tile size: aim for ~TARGET_GRID_STEPS grid steps, bounded to
    # [MIN_TB_ROWS, TB_ROWS_MAX] and to the array itself.  tb is always a
    # multiple of the sublane count; the last grid block may be ragged
    # (Pallas clips the boundary DMAs; garbage rows are sliced off below).
    tb = _round_up(max(1, rows_pad // TARGET_GRID_STEPS), sub)
    tb = min(TB_ROWS_MAX, max(MIN_TB_ROWS, tb))
    tb = min(tb, rows_pad)
    grid = (pl.cdiv(rows_pad, tb),)

    itemsize = jnp.dtype(compute_dtype).itemsize
    cost = pl.CostEstimate(
        flops=2 * rows_pad * LANES * LANES,
        transcendentals=0,
        bytes_accessed=itemsize * (2 * rows_pad * LANES + LANES * LANES + LANES),
    )

    out = pl.pallas_call(
        _fcn_kernel,
        out_shape=jax.ShapeDtypeStruct((rows_pad, LANES), compute_dtype),
        grid=grid,
        in_specs=[
            pl.BlockSpec((tb, LANES), lambda i: (i, 0)),       # activations: batch-tiled
            pl.BlockSpec((LANES, LANES), lambda i: (0, 0)),    # weight: VMEM-resident
            pl.BlockSpec((1, LANES), lambda i: (0, 0)),        # bias: VMEM-resident
        ],
        out_specs=pl.BlockSpec((tb, LANES), lambda i: (i, 0)),
        compiler_params=pltpu.CompilerParams(
            dimension_semantics=("parallel",),                 # megacore sharding
        ),
        cost_estimate=cost,
    )(xp, w_packed, b_packed)

    # Unpack lanes back to (B, NUM_CLASSES) and drop batch padding.
    return out.reshape(rows_pad * PACK, NUM_CLASSES)[:B]


if __name__ == "__main__":
    key = jax.random.PRNGKey(0)
    kx, kw, kb, kx_big, kx_rag = jax.random.split(key, 5)

    # Small 4-D input that flattens to NUM_CLASSES features per sample.
    x = jax.random.normal(kx, (2, 2, 2, 2), dtype=jnp.float32)

    # Deterministic init mimicking nn.Linear's uniform(-1/sqrt(fan_in), ...).
    bound = 1.0 / jnp.sqrt(jnp.float32(NUM_CLASSES))
    weight = jax.random.uniform(
        kw, (NUM_CLASSES, NUM_CLASSES), minval=-bound, maxval=bound, dtype=jnp.float32)
    bias = jax.random.uniform(
        kb, (NUM_CLASSES,), minval=-bound, maxval=bound, dtype=jnp.float32)

    # One-time parameter packing (not part of the per-call path).
    w_packed, b_packed = prepare_fcn_params(weight, bias)

    # 1) Tiny batch via the XLA fallback path.
    ref = x.reshape(x.shape[0], -1) @ weight.T + bias
    out = jax.block_until_ready(fcn_forward(x, w_packed, b_packed))
    assert out.shape == (2, NUM_CLASSES)
    assert jnp.allclose(out, ref, atol=1e-5, rtol=1e-5)

    # 2) Same tiny batch forced through the Pallas kernel (single 8x128 tile).
    out_k = jax.block_until_ready(fcn_forward(x, w_packed, b_packed, min_kernel_rows=0))
    assert out_k.shape == (2, NUM_CLASSES)
    assert jnp.allclose(out_k, ref, atol=1e-5, rtol=1e-5)

    # 3) Large batch: rows=2048, tb=256 -> even 8-step parallel grid, no padding.
    big_b = 32768
    xb = jax.random.normal(kx_big, (big_b, NUM_CLASSES), dtype=jnp.float32)
    ref_b = xb @ weight.T + bias
    out_b = jax.block_until_ready(fcn_forward(xb, w_packed, b_packed))
    assert out_b.shape == (big_b, NUM_CLASSES)
    assert jnp.allclose(out_b, ref_b, atol=1e-4, rtol=1e-4)

    # 4) Ragged batch: rows padded only to a sublane multiple, ragged last block.
    rag_b = 10000
    xr = jax.random.normal(kx_rag, (rag_b, NUM_CLASSES), dtype=jnp.float32)
    ref_r = xr @ weight.T + bias
    out_r = jax.block_until_ready(fcn_forward(xr, w_packed, b_packed))
    assert out_r.shape == (rag_b, NUM_CLASSES)
    assert jnp.allclose(out_r, ref_r, atol=1e-4, rtol=1e-4)

    # 5) Optional bf16 parameter path (v5e MXU / halved HBM bytes), loose tol.
    w_bf, b_bf = prepare_fcn_params(weight, bias, param_dtype=jnp.bfloat16)
    out_bf = jax.block_until_ready(fcn_forward(xb, w_bf, b_bf))
    assert out_bf.shape == (big_b, NUM_CLASSES)
    assert jnp.allclose(out_bf.astype(jnp.float32), ref_b, atol=1e-1, rtol=5e-2)

    print("KERNEL_OK")
</pallas_src>

<mosaic_0001>
module attributes {stable_mosaic.version = 11 : i64} {
  func.func @_fcn_kernel(%arg0: i32, %arg1: memref<8x128xf32, #tpu.memory_space<vmem>>, %arg2: memref<128x128xf32, #tpu.memory_space<vmem>>, %arg3: memref<1x128xf32, #tpu.memory_space<vmem>>, %arg4: memref<8x128xf32, #tpu.memory_space<vmem>>) attributes {dimension_semantics = [#tpu.dimension_semantics<parallel>], iteration_bounds = array<i64: 1>, scalar_prefetch = 0 : i64, scratch_operands = 0 : i64, tpu.core_type = #tpu.core_type<tc>, window_params = [{transform_indices = @transform_0, window_bounds = array<i64: 8, 128>}, {pipeline_mode = #tpu.pipeline_mode<synchronous>, transform_indices = @transform_1, window_bounds = array<i64: 128, 128>}, {pipeline_mode = #tpu.pipeline_mode<synchronous>, transform_indices = @transform_2, window_bounds = array<i64: 1, 128>}, {transform_indices = @transform_3, window_bounds = array<i64: 8, 128>}]} {
    %c0 = arith.constant 0 : index
    %c0_0 = arith.constant 0 : index
    %0 = vector.load %arg1[%c0, %c0_0] : memref<8x128xf32, #tpu.memory_space<vmem>>, vector<8x128xf32>
    %c0_1 = arith.constant 0 : index
    %c0_2 = arith.constant 0 : index
    %1 = vector.load %arg2[%c0_1, %c0_2] : memref<128x128xf32, #tpu.memory_space<vmem>>, vector<128x128xf32>
    %cst = arith.constant dense<0.000000e+00> : vector<8x128xf32>
    %2 = tpu.matmul %0, %1, %cst {dimension_numbers = #tpu.dot_dimension_numbers<[1], [0], [0], [1], [0, 0, 1, 1], [], []>} : vector<8x128xf32>, vector<128x128xf32>, vector<8x128xf32> -> vector<8x128xf32>
    %c0_3 = arith.constant 0 : index
    %c0_4 = arith.constant 0 : index
    %3 = vector.load %arg3[%c0_3, %c0_4] : memref<1x128xf32, #tpu.memory_space<vmem>>, vector<1x128xf32>
    %4 = vector.broadcast %3 : vector<1x128xf32> to vector<8x128xf32>
    %5 = arith.addf %2, %4 : vector<8x128xf32>
    %c0_5 = arith.constant 0 : index
    %c0_6 = arith.constant 0 : index
    %6 = vector.load %arg4[%c0_5, %c0_6] : memref<8x128xf32, #tpu.memory_space<vmem>>, vector<8x128xf32>
    tpu.vector_store %arg4[%c0_5, %c0_6], %5 {strides = array<i32>} : memref<8x128xf32, #tpu.memory_space<vmem>>, vector<8x128xf32>,
    return
  }
  func.func @transform_0(%arg0: i32) -> (i32, i32) {
    %c0_i32 = arith.constant 0 : i32
    %c0_i32_0 = arith.constant 0 : i32
    return %arg0, %c0_i32 : i32, i32
  }
  func.func @transform_1(%arg0: i32) -> (i32, i32) {
    %c0_i32 = arith.constant 0 : i32
    %c0_i32_0 = arith.constant 0 : i32
    %c0_i32_1 = arith.constant 0 : i32
    return %c0_i32, %c0_i32_0 : i32, i32
  }
  func.func @transform_2(%arg0: i32) -> (i32, i32) {
    %c0_i32 = arith.constant 0 : i32
    %c0_i32_0 = arith.constant 0 : i32
    %c0_i32_1 = arith.constant 0 : i32
    return %c0_i32, %c0_i32_0 : i32, i32
  }
  func.func @transform_3(%arg0: i32) -> (i32, i32) {
    %c0_i32 = arith.constant 0 : i32
    %c0_i32_0 = arith.constant 0 : i32
    return %arg0, %c0_i32 : i32, i32
  }
}

</mosaic_0001>

<llo_original>
// kernel: tpu_custom_call.1
$region0: #{tpu_custom_call.1}
  #allocation0 [shape = 'u32[]', space=smem, size = 0x4, offset = 0x4, fixed_abs, tag = 'smem constant byte address 0x4 - core index']
  #allocation1 [shape = 'u32[144,128]{1,0:T(1,128)}', space=vmem, size = 0x12000, scoped, tag = 'internal scratch']
  %s0 = inlined_call_operand.hbm [shape: f32[8,128], index: 0, kind: input, shape index: {}]
  %s1 = inlined_call_operand.hbm [shape: f32[128,128], index: 1, kind: input, shape index: {}]
  %s2 = inlined_call_operand.vmem [shape: f32[1,128], index: 2, kind: input, shape index: {}]
  %s3 = inlined_call_operand.hbm [shape: f32[8,128], index: 3, kind: output, shape index: {}]
  %s4 = sld [smem:[#allocation0]]
  $region30: #{tpu_custom_call.1} parent=0
    _
  %s6 = ssub.s32 1, %s4
  %s7 = scalar_select 0, %s6, %s4
  $region1: #{tpu_custom_call.1} parent=0
    #allocation2 [shape = 'u8[4096]{0}', space=vmem, size = 0x1000, scoped, tag = 'input window, operand 0, single buffered']
    #allocation3 [shape = 's32[1]{0}', space=sflag, size = 0x4, scoped, tag = 'scoped memory for tpu_custom_call.1']
    #allocation4 [shape = 's32[1]{0}', space=sflag, size = 0x4, scoped, tag = 'scoped memory for tpu_custom_call.1']
    #allocation5 [shape = 'u8[65536]{0}', space=vmem, size = 0x10000, scoped, tag = 'input window, operand 1, single buffered']
    #allocation6 [shape = 's32[1]{0}', space=sflag, size = 0x4, scoped, tag = 'scoped memory for tpu_custom_call.1']
    #allocation7 [shape = 'u8[4096]{0}', space=vmem, size = 0x1000, scoped, tag = 'output window, operand 0, single buffered']
    %8 = vsyncpa [#allocation3], 0
    %9 = vsyncpa [#allocation6], 0
    %10 = vsyncpa [#allocation4], 0
    // Predicated region
    $region2: #{tpu_custom_call.1} parent=1 // pred_check
      _
    $region3: #{tpu_custom_call.1} parent=1 // pred_check_branch
      %12 = sbr.rel (0) target = $region5
    $region4: #{tpu_custom_call.1} parent=1 // pred_region
      %s14 = ssub.s32 128, 128
      %15 = vsyncadd [#allocation3], %s14
      %s17 = sshll.u32 [#allocation2], 4
      %s18 = int_to_ptr.vmem [resolvable:$true] %s17
      %20 = dma.hbm_to_vmem [thread:$0]  %s0, 128, %s18, [#allocation3]
    $region5: #{tpu_custom_call.1} parent=1 // pred_fallthru
      _
    // Predicated region
    $region6: #{tpu_custom_call.1} parent=1 // pred_check
      _
    $region7: #{tpu_custom_call.1} parent=1 // pred_check_branch
      %22 = sbr.rel (0) target = $region9
    $region8: #{tpu_custom_call.1} parent=1 // pred_region
      %s24 = ssub.s32 2048, 2048
      %25 = vsyncadd [#allocation6], %s24
      %s26 = sshll.u32 [#allocation5], 4
      %s27 = int_to_ptr.vmem [resolvable:$true] %s26
      %32 = dma.hbm_to_vmem [thread:$0]  %s1, 2048, %s27, [#allocation6], 128, 128, 8
    $region9: #{tpu_custom_call.1} parent=1 // pred_fallthru
      _
    // Predicated region
    $region10: #{tpu_custom_call.1} parent=1 // pred_check
      _
    $region11: #{tpu_custom_call.1} parent=1 // pred_check_branch
      %34 = sbr.rel (0) target = $region13
    $region12: #{tpu_custom_call.1} parent=1 // pred_region
      _
    $region13: #{tpu_custom_call.1} parent=1 // pred_fallthru
      _
    // Predicated region
    $region14: #{tpu_custom_call.1} parent=1 // pred_check
      _
    $region15: #{tpu_custom_call.1} parent=1 // pred_check_branch
      %36 = sbr.rel (0) target = $region17
    $region16: #{tpu_custom_call.1} parent=1 // pred_region
      %37 = dma.done [#allocation3], 128
    $region17: #{tpu_custom_call.1} parent=1 // pred_fallthru
      _
    // Predicated region
    $region18: #{tpu_custom_call.1} parent=1 // pred_check
      _
    $region19: #{tpu_custom_call.1} parent=1 // pred_check_branch
      %39 = sbr.rel (0) target = $region21
    $region20: #{tpu_custom_call.1} parent=1 // pred_region
      %40 = dma.done [#allocation6], 2048
    $region21: #{tpu_custom_call.1} parent=1 // pred_fallthru
      _
    %v41 = vld [vmem:[#allocation2] sm:$0xff]
    %v42 = vld [vmem:[#allocation5] sm:$0xff]
    %v43 = vld [vmem:[#allocation5 + $0x8] sm:$0xff]
    %v44 = vld [vmem:[#allocation5 + $0x10] sm:$0xff]
    %v45 = vld [vmem:[#allocation5 + $0x18] sm:$0xff]
    %v46 = vld [vmem:[#allocation5 + $0x20] sm:$0xff]
    %v47 = vld [vmem:[#allocation5 + $0x28] sm:$0xff]
    %v48 = vld [vmem:[#allocation5 + $0x30] sm:$0xff]
    %v49 = vld [vmem:[#allocation5 + $0x38] sm:$0xff]
    %v50 = vld [vmem:[#allocation5 + $0x40] sm:$0xff]
    %v51 = vld [vmem:[#allocation5 + $0x48] sm:$0xff]
    %v52 = vld [vmem:[#allocation5 + $0x50] sm:$0xff]
    %v53 = vld [vmem:[#allocation5 + $0x58] sm:$0xff]
    %v54 = vld [vmem:[#allocation5 + $0x60] sm:$0xff]
    %v55 = vld [vmem:[#allocation5 + $0x68] sm:$0xff]
    %v56 = vld [vmem:[#allocation5 + $0x70] sm:$0xff]
    %v57 = vld [vmem:[#allocation5 + $0x78] sm:$0xff]
    %v58 = vld [vmem:[%s2] sm:$0x1]
    %v60 = vlaneseq
    %v61 = vshrl.u32 %v60, 7
    %v62 = vsub.s32 0, %v61
    %v63 = vrot.slane %v58, %v62
    %65 = vmatprep.subr.mxu0 0.0
    %66 = vmatpush1.msra.mxu0 %v57
    %67 = vmatprep.subr.mxu0 0.0
    %68 = vmatpush1.msra.mxu0 %v56
    %69 = vmatprep.subr.mxu0 0.0
    %70 = vmatpush1.msra.mxu0 %v55
    %71 = vmatprep.subr.mxu0 0.0
    %72 = vmatpush1.msra.mxu0 %v54
    %73 = vmatprep.subr.mxu0 0.0
    %74 = vmatpush1.msra.mxu0 %v53
    %75 = vmatprep.subr.mxu0 0.0
    %76 = vmatpush1.msra.mxu0 %v52
    %77 = vmatprep.subr.mxu0 0.0
    %78 = vmatpush1.msra.mxu0 %v51
    %79 = vmatprep.subr.mxu0 0.0
    %80 = vmatpush1.msra.mxu0 %v50
    %81 = vmatprep.subr.mxu0 0.0
    %82 = vmatpush1.msra.mxu0 %v49
    %83 = vmatprep.subr.mxu0 0.0
    %84 = vmatpush1.msra.mxu0 %v48
    %85 = vmatprep.subr.mxu0 0.0
    %86 = vmatpush1.msra.mxu0 %v47
    %87 = vmatprep.subr.mxu0 0.0
    %88 = vmatpush1.msra.mxu0 %v46
    %89 = vmatprep.subr.mxu0 0.0
    %90 = vmatpush1.msra.mxu0 %v45
    %91 = vmatprep.subr.mxu0 0.0
    %92 = vmatpush1.msra.mxu0 %v44
    %93 = vmatprep.subr.mxu0 0.0
    %94 = vmatpush1.msra.mxu0 %v43
    %95 = vmatprep.subr.mxu0 0.0
    %96 = vmatpush1.msra.mxu0 %v42
    %97 = vmatprep.subr.mxu0 0.0
    %98 = vmatpush2.msra.mxu0 0.0
    %99 = vmatprep.subr.mxu0 0.0
    %100 = vmatpush2.msra.mxu0 0.0
    %101 = vmatprep.subr.mxu0 0.0
    %102 = vmatpush2.msra.mxu0 0.0
    %103 = vmatprep.subr.mxu0 0.0
    %104 = vmatpush2.msra.mxu0 0.0
    %105 = vmatprep.subr.mxu0 0.0
    %106 = vmatpush2.msra.mxu0 0.0
    %107 = vmatprep.subr.mxu0 0.0
    %108 = vmatpush2.msra.mxu0 0.0
    %109 = vmatprep.subr.mxu0 0.0
    %110 = vmatpush2.msra.mxu0 0.0
    %111 = vmatprep.subr.mxu0 0.0
    %112 = vmatpush2.msra.mxu0 0.0
    %113 = vmatprep.subr.mxu0 0.0
    %114 = vmatpush2.msra.mxu0 0.0
    %115 = vmatprep.subr.mxu0 0.0
    %116 = vmatpush2.msra.mxu0 0.0
    %117 = vmatprep.subr.mxu0 0.0
    %118 = vmatpush2.msra.mxu0 0.0
    %119 = vmatprep.subr.mxu0 0.0
    %120 = vmatpush2.msra.mxu0 0.0
    %121 = vmatprep.subr.mxu0 0.0
    %122 = vmatpush2.msra.mxu0 0.0
    %123 = vmatprep.subr.mxu0 0.0
    %124 = vmatpush2.msra.mxu0 0.0
    %125 = vmatprep.subr.mxu0 0.0
    %126 = vmatpush2.msra.mxu0 0.0
    %127 = vmatprep.subr.mxu0 0.0
    %128 = vmatpush2.msra.mxu0 0.0
    %129 = vmatprep.mubr.f32.mxu0 0.0
    %130 = vmatmul.mubr.f32.gmra.mxu0 %v41
    %v131 = vpop.f32.mrf.mxu0
    %v132 = vadd.f32 %v63, %v131
    %v133 = vpop.f32.mrf.mxu0
    %134 = vdwg.mxu0
    %135 = vst [vmem:[#allocation7] sm:$0xff] %v132
    // Predicated region
    $region22: #{tpu_custom_call.1} parent=1 // pred_check
      _
    $region23: #{tpu_custom_call.1} parent=1 // pred_check_branch
      %137 = sbr.rel (0) target = $region25
    $region24: #{tpu_custom_call.1} parent=1 // pred_region
      %s139 = ssub.s32 128, 128
      %140 = vsyncadd [#allocation4], %s139
      %s142 = sshll.u32 [#allocation7], 4
      %s143 = int_to_ptr.vmem [resolvable:$true] %s142
      %145 = dma.vmem_to_hbm [thread:$0]  %s143, 128, %s3, [#allocation4]
    $region25: #{tpu_custom_call.1} parent=1 // pred_fallthru
      _
    // Predicated region
    $region26: #{tpu_custom_call.1} parent=1 // pred_check
      _
    $region27: #{tpu_custom_call.1} parent=1 // pred_check_branch
      %147 = sbr.rel (0) target = $region29
    $region28: #{tpu_custom_call.1} parent=1 // pred_region
      %148 = dma.done [#allocation4], 128
    $region29: #{tpu_custom_call.1} parent=1 // pred_fallthru
      _
    %149 = vsyncpa [#allocation3], 1
    %150 = vsyncpa [#allocation6], 1
    %151 = vsyncpa [#allocation4], 1

</llo_original>
